<compile_context>
chip_gen: v7x
topology: tpu7x:2x2x1
jax: 0.10.0
libtpu: 0.0.40
codegen_flags: <defaults>
</compile_context>

<pallas_src>
import functools

import jax
import jax.numpy as jnp
from jax import lax
from jax.experimental import pallas as pl
from jax.experimental.pallas import tpu as pltpu


def _round_up(x, a):
    return ((x + a - 1) // a) * a


# ----------------------------------------------------------------------------
# Kernel 1: batch-tiled covariance
# ----------------------------------------------------------------------------
def _cov_kernel_flat(x_ref, w_ref, o_ref, *, row_block):
    # x_ref: (tb, n, m)   w_ref: (1, m)   o_ref: (tb, n*n)
    xv = x_ref[...]
    tb, n, m = xv.shape
    w = w_ref[...][None]                                  # (1, 1, m)
    mu = jnp.sum(xv * w, axis=-1, keepdims=True)          # weighted mean over time
    xd = xv - mu
    inv_m = 1.0 / m
    # Row-block Gram: R query rows at a time, one contiguous lane-dense store per
    # block (instead of n single-row stores) — caps vreg live range, fewer XLU
    # relayouts / masked stores.
    for i0 in range(0, n, row_block):
        blk = lax.dot_general(
            xd[:, i0:i0 + row_block, :], xd,
            dimension_numbers=(((2,), (2,)), ((0,), (0,))),
            preferred_element_type=jnp.float32,
        ) * inv_m                                          # (tb, R, n)
        o_ref[:, i0 * n:(i0 + row_block) * n] = blk.reshape(tb, row_block * n)


def _cov_kernel_block(x_ref, w_ref, o_ref):
    # Used when n % 128 == 0: (tb, n, n) output block is already lane-dense; the
    # flatten to (B, n*n) happens as a free reshape in the JAX wrapper.
    xv = x_ref[...]
    _, _, m = xv.shape
    w = w_ref[...][None]
    mu = jnp.sum(xv * w, axis=-1, keepdims=True)
    xd = xv - mu
    o_ref[...] = lax.dot_general(
        xd, xd,
        dimension_numbers=(((2,), (2,)), ((0,), (0,))),
        preferred_element_type=jnp.float32,
    ) * (1.0 / m)


def _pick_batch_tile(B, n, m, vmem_budget):
    # Size tb so the double-buffered (x block + cov temp + out block) stays in
    # budget; prefer >= 2 grid steps so the parallel batch axis can shard across
    # v7x's two TensorCores.
    bytes_per_item = (n * m + 2 * n * n) * 4
    cap = max(1, vmem_budget // (2 * bytes_per_item))
    cap = min(cap, 64, B)
    cands = [t for t in range(1, cap + 1) if B % t == 0 and (t % 8 == 0 or t == B)]
    if not cands:
        return B
    multi = [t for t in cands if B // t >= 2]
    return max(multi) if multi else max(cands)


def covariance_flat(x, w_mean, *, vmem_budget=16 << 20):
    """x: (B, n, m) f32, w_mean: (1, m) f32 -> (B, n*n) f32 (row-major flat cov)."""
    B, n, m = x.shape
    tb = _pick_batch_tile(B, n, m, vmem_budget)
    grid = (B // tb,)
    cparams = pltpu.CompilerParams(
        dimension_semantics=("parallel",),
        vmem_limit_bytes=32 << 20,
    )
    if n % 128 == 0:
        out = pl.pallas_call(
            _cov_kernel_block,
            out_shape=jax.ShapeDtypeStruct((B, n, n), jnp.float32),
            grid=grid,
            in_specs=[pl.BlockSpec((tb, n, m), lambda b: (b, 0, 0)),
                      pl.BlockSpec((1, m), lambda b: (0, 0))],
            out_specs=pl.BlockSpec((tb, n, n), lambda b: (b, 0, 0)),
            compiler_params=cparams,
        )(x, w_mean)
        return out.reshape(B, n * n)                      # contiguous: free reshape
    # Small / unaligned n: flat lane-dense output avoids sub-128-lane slabs.
    row_block = 1
    for r in range(1, n + 1):
        if n % r == 0 and r * n <= 1024:
            row_block = r
    return pl.pallas_call(
        functools.partial(_cov_kernel_flat, row_block=row_block),
        out_shape=jax.ShapeDtypeStruct((B, n * n), jnp.float32),
        grid=grid,
        in_specs=[pl.BlockSpec((tb, n, m), lambda b: (b, 0, 0)),
                  pl.BlockSpec((1, m), lambda b: (0, 0))],
        out_specs=pl.BlockSpec((tb, n * n), lambda b: (b, 0)),
        compiler_params=cparams,
    )(x, w_mean)


# ----------------------------------------------------------------------------
# Kernel 2: tiled adapter linear   y = x @ W_t + b   (W_t pre-transposed)
# ----------------------------------------------------------------------------
def _linear_kernel_single_k(x_ref, wt_ref, b_ref, o_ref):
    # Whole K fits one tile: no accumulator scratch, no init/finalize.
    o_ref[...] = (jnp.dot(x_ref[...], wt_ref[...],
                          preferred_element_type=jnp.float32)
                  + b_ref[...]).astype(o_ref.dtype)


def _linear_kernel_acc_resident(x_ref, wt_ref, b_ref, o_ref, acc_ref):
    # x_ref: (n_k, tm, tk) — full activation block resident across K/N steps.
    k = pl.program_id(2)

    @pl.when(k == 0)
    def _():
        acc_ref[...] = jnp.zeros_like(acc_ref)

    acc_ref[...] += jnp.dot(x_ref[k], wt_ref[...],
                            preferred_element_type=jnp.float32)

    @pl.when(k == pl.num_programs(2) - 1)
    def _():
        o_ref[...] = (acc_ref[...] + b_ref[...]).astype(o_ref.dtype)


def _linear_kernel_acc(x_ref, wt_ref, b_ref, o_ref, acc_ref):
    # x_ref: (tm, tk) streamed per K step.
    k = pl.program_id(2)

    @pl.when(k == 0)
    def _():
        acc_ref[...] = jnp.zeros_like(acc_ref)

    acc_ref[...] += jnp.dot(x_ref[...], wt_ref[...],
                            preferred_element_type=jnp.float32)

    @pl.when(k == pl.num_programs(2) - 1)
    def _():
        o_ref[...] = (acc_ref[...] + b_ref[...]).astype(o_ref.dtype)


def adapter_linear(x_flat, weight_t, bias, *, vmem_budget=28 << 20):
    """x_flat: (B, ss), weight_t: (ss, nn) pre-transposed, bias: (nn,) -> (B, nn)."""
    B, ss = x_flat.shape
    ss_w, nn = weight_t.shape
    assert ss_w == ss, (ss_w, ss)
    f32 = 4

    # N tile: 128-aligned (already saturates v5e's 128-wide MXU; fine on v6e/v7x),
    # capped at 512; prefer >= 2 N tiles so the parallel N axis can shard across
    # v7x's two TensorCores (M collapses to one tile when tm = B).
    tn = min(512, _round_up(nn, 128))
    while tn > 128 and _round_up(nn, tn) // tn < 2:
        tn //= 2
    tk = min(512, _round_up(ss, 128))
    ss_p = _round_up(ss, tk)
    nn_p = _round_up(nn, tn)

    def _fits(tm, x_resident):
        x_b = 2 * tm * (ss_p if x_resident else tk) * f32
        w_b = 2 * tk * tn * f32
        o_b = 2 * tm * tn * f32
        acc_b = tm * tn * f32
        return x_b + w_b + o_b + acc_b + 2 * tn * f32 <= vmem_budget

    # M tile: whole batch if it fits — the (ss x nn) weight is then read from HBM
    # exactly once (dominant traffic of this memory-bound matmul).
    cands = sorted({t for t in range(8, B + 1, 8) if B % t == 0} | {B}, reverse=True)
    tm, x_resident = cands[-1], False
    for t in cands:
        if _fits(t, True):
            tm, x_resident = t, True
            break
        if _fits(t, False):
            tm, x_resident = t, False
            break

    # Zero-pad K (contributes nothing) and N (sliced off afterwards) up to tile
    # multiples — never fall back to a full-extent weight block.
    if ss_p != ss:
        x_flat = jnp.pad(x_flat, ((0, 0), (0, ss_p - ss)))
        weight_t = jnp.pad(weight_t, ((0, ss_p - ss), (0, 0)))
    if nn_p != nn:
        weight_t = jnp.pad(weight_t, ((0, 0), (0, nn_p - nn)))
        bias = jnp.pad(bias, ((0, nn_p - nn),))
    bias2d = bias.reshape(1, nn_p)

    grid = (B // tm, nn_p // tn, ss_p // tk)
    n_k = grid[2]
    cparams = pltpu.CompilerParams(
        dimension_semantics=("parallel", "parallel", "arbitrary"),
        vmem_limit_bytes=48 << 20,
    )
    w_spec = pl.BlockSpec((tk, tn), lambda i, j, k: (k, j))
    b_spec = pl.BlockSpec((1, tn), lambda i, j, k: (0, j))
    o_spec = pl.BlockSpec((tm, tn), lambda i, j, k: (i, j))

    if n_k == 1:
        out = pl.pallas_call(
            _linear_kernel_single_k,
            out_shape=jax.ShapeDtypeStruct((B, nn_p), jnp.float32),
            grid=grid,
            in_specs=[pl.BlockSpec((tm, tk), lambda i, j, k: (i, k)),
                      w_spec, b_spec],
            out_specs=o_spec,
            compiler_params=cparams,
        )(x_flat, weight_t, bias2d)
    elif x_resident:
        # Hold the activations in VMEM across the whole K (and N) sweep: store as
        # (n_k, B, tk) and index the K slab along the (well-supported) first axis.
        x3 = x_flat.reshape(B, n_k, tk).transpose(1, 0, 2)
        out = pl.pallas_call(
            _linear_kernel_acc_resident,
            out_shape=jax.ShapeDtypeStruct((B, nn_p), jnp.float32),
            grid=grid,
            in_specs=[pl.BlockSpec((n_k, tm, tk), lambda i, j, k: (0, i, 0)),
                      w_spec, b_spec],
            out_specs=o_spec,
            scratch_shapes=[pltpu.VMEM((tm, tn), jnp.float32)],
            compiler_params=cparams,
        )(x3, weight_t, bias2d)
    else:
        out = pl.pallas_call(
            _linear_kernel_acc,
            out_shape=jax.ShapeDtypeStruct((B, nn_p), jnp.float32),
            grid=grid,
            in_specs=[pl.BlockSpec((tm, tk), lambda i, j, k: (i, k)),
                      w_spec, b_spec],
            out_specs=o_spec,
            scratch_shapes=[pltpu.VMEM((tm, tn), jnp.float32)],
            compiler_params=cparams,
        )(x_flat, weight_t, bias2d)
    return out[:, :nn] if nn_p != nn else out


# ----------------------------------------------------------------------------
# CovarianceAdapter forward (glue in plain JAX, compute in Pallas)
# ----------------------------------------------------------------------------
def covariance_adapter_forward(x, params):
    """x: (B, n, m) -> (B, n, n), matching CovarianceAdapter.forward."""
    B, n, m = x.shape
    flat = covariance_flat(x, params["mean_weight"])          # cov(x).view(-1, size)
    out = adapter_linear(flat, params["adapter_w_t"], params["adapter_b"])
    return out.reshape(B, n, n)                                # .view(-1, n, n)


def init_params(key, n, m):
    # cov.mean.weight stand-in: uniform, normalized time weights, shape (1, m).
    mean_weight = jnp.full((1, m), 1.0 / m, dtype=jnp.float32)
    # adapter: s*s == n*n -> weight initialized to identity (per reference __init__),
    # stored pre-transposed (in_features, out_features) so the kernel never
    # transposes it on the hot path.
    adapter_w_t = jnp.eye(n * n, dtype=jnp.float32)
    bound = 1.0 / jnp.sqrt(float(n * n))
    adapter_b = jax.random.uniform(
        key, (n * n,), dtype=jnp.float32, minval=-bound, maxval=bound)
    return {"mean_weight": mean_weight,
            "adapter_w_t": adapter_w_t,
            "adapter_b": adapter_b}


def reference_forward(x, params):
    """Pure-JAX reference for the correctness check."""
    B, n, m = x.shape
    w = params["mean_weight"]                                  # (1, m)
    mu = jnp.sum(x * w[None, :, :], axis=-1, keepdims=True)
    xd = x - mu
    cov = jnp.einsum("bit,bjt->bij", xd, xd) / m
    flat = cov.reshape(B, n * n)
    out = flat @ params["adapter_w_t"] + params["adapter_b"][None, :]
    return out.reshape(B, n, n)


if __name__ == "__main__":
    key = jax.random.PRNGKey(0)
    k1, k2, k3, k4 = jax.random.split(key, 4)

    # Case 1: input_shape = (16, 32), batch = 16 — n*n = 256 is lane-/MXU-aligned,
    # adapter weight is the identity exactly as in the reference __init__.
    B, n, m = 16, 16, 32
    x = jax.random.normal(k1, (B, n, m), dtype=jnp.float32)
    params = init_params(k2, n, m)
    out = jax.block_until_ready(covariance_adapter_forward(x, params))
    ref = reference_forward(x, params)
    assert out.shape == (B, n, n), out.shape
    err1 = float(jnp.max(jnp.abs(out - ref)))
    assert jnp.allclose(out, ref, atol=1e-4, rtol=1e-4), err1

    # Case 2: n*n = 576 (not 128-divisible) with a random adapter weight —
    # exercises the zero-padding path, the multi-K accumulated matmul with the
    # resident activation block, and the padded-output slice.
    B2, n2, m2 = 24, 24, 40
    x2 = jax.random.normal(k3, (B2, n2, m2), dtype=jnp.float32)
    ka, kb = jax.random.split(k4)
    params2 = {
        "mean_weight": jnp.full((1, m2), 1.0 / m2, dtype=jnp.float32),
        "adapter_w_t": 0.05 * jax.random.normal(ka, (n2 * n2, n2 * n2), dtype=jnp.float32),
        "adapter_b": 0.1 * jax.random.normal(kb, (n2 * n2,), dtype=jnp.float32),
    }
    out2 = jax.block_until_ready(covariance_adapter_forward(x2, params2))
    ref2 = reference_forward(x2, params2)
    assert out2.shape == (B2, n2, n2), out2.shape
    err2 = float(jnp.max(jnp.abs(out2 - ref2)))
    assert jnp.allclose(out2, ref2, atol=2e-3, rtol=2e-3), err2

    print("KERNEL_OK")
</pallas_src>

<mosaic_0001>
module attributes {stable_mosaic.version = 11 : i64} {
  func.func @_cov_kernel_flat(%arg0: i32, %arg1: memref<8x16x32xf32, #tpu.memory_space<vmem>>, %arg2: memref<1x32xf32, #tpu.memory_space<vmem>>, %arg3: memref<8x256xf32, #tpu.memory_space<vmem>>) attributes {dimension_semantics = [#tpu.dimension_semantics<parallel>], iteration_bounds = array<i64: 2>, scalar_prefetch = 0 : i64, scratch_operands = 0 : i64, tpu.core_type = #tpu.core_type<tc>, window_params = [{transform_indices = @transform_0, window_bounds = array<i64: 8, 16, 32>}, {pipeline_mode = #tpu.pipeline_mode<synchronous>, transform_indices = @transform_1, window_bounds = array<i64: 1, 32>}, {transform_indices = @transform_2, window_bounds = array<i64: 8, 256>}]} {
    %c0 = arith.constant 0 : index
    %c0_0 = arith.constant 0 : index
    %c0_1 = arith.constant 0 : index
    %0 = vector.load %arg1[%c0, %c0_0, %c0_1] : memref<8x16x32xf32, #tpu.memory_space<vmem>>, vector<8x16x32xf32>
    %c0_2 = arith.constant 0 : index
    %c0_3 = arith.constant 0 : index
    %1 = vector.load %arg2[%c0_2, %c0_3] : memref<1x32xf32, #tpu.memory_space<vmem>>, vector<1x32xf32>
    %2 = vector.shape_cast %1 : vector<1x32xf32> to vector<1x1x32xf32>
    %3 = vector.broadcast %2 : vector<1x1x32xf32> to vector<8x16x32xf32>
    %4 = arith.mulf %0, %3 : vector<8x16x32xf32>
    %cst = arith.constant dense<0.000000e+00> : vector<8x16xf32>
    %5 = vector.multi_reduction <add>, %4, %cst [2] : vector<8x16x32xf32> to vector<8x16xf32>
    %6 = vector.shape_cast %5 : vector<8x16xf32> to vector<8x16x1xf32>
    %7 = vector.broadcast %6 : vector<8x16x1xf32> to vector<8x16x32xf32>
    %8 = arith.subf %0, %7 : vector<8x16x32xf32>
    %cst_4 = arith.constant dense<0.000000e+00> : vector<8x16x16xf32>
    %9 = tpu.matmul %8, %8, %cst_4 {dimension_numbers = #tpu.dot_dimension_numbers<[2], [2], [1], [1], [0, 0, 0, 1, 1, 1], [0], [0]>} : vector<8x16x32xf32>, vector<8x16x32xf32>, vector<8x16x16xf32> -> vector<8x16x16xf32>
    %cst_5 = arith.constant 3.125000e-02 : f32
    %10 = vector.broadcast %cst_5 : f32 to vector<8x16x16xf32>
    %11 = arith.mulf %9, %10 : vector<8x16x16xf32>
    %12 = vector.shape_cast %11 : vector<8x16x16xf32> to vector<8x256xf32>
    %c0_6 = arith.constant 0 : index
    %c0_7 = arith.constant 0 : index
    %13 = vector.load %arg3[%c0_6, %c0_7] : memref<8x256xf32, #tpu.memory_space<vmem>>, vector<8x256xf32>
    tpu.vector_store %arg3[%c0_6, %c0_7], %12 {strides = array<i32>} : memref<8x256xf32, #tpu.memory_space<vmem>>, vector<8x256xf32>,
    return
  }
  func.func @transform_0(%arg0: i32) -> (i32, i32, i32) {
    %c0_i32 = arith.constant 0 : i32
    %c0_i32_0 = arith.constant 0 : i32
    %c0_i32_1 = arith.constant 0 : i32
    return %arg0, %c0_i32, %c0_i32_0 : i32, i32, i32
  }
  func.func @transform_1(%arg0: i32) -> (i32, i32) {
    %c0_i32 = arith.constant 0 : i32
    %c0_i32_0 = arith.constant 0 : i32
    %c0_i32_1 = arith.constant 0 : i32
    return %c0_i32, %c0_i32_0 : i32, i32
  }
  func.func @transform_2(%arg0: i32) -> (i32, i32) {
    %c0_i32 = arith.constant 0 : i32
    %c0_i32_0 = arith.constant 0 : i32
    return %arg0, %c0_i32 : i32, i32
  }
}

</mosaic_0001>

<llo_original>
// kernel: tpu_custom_call.1
$region0: #{tpu_custom_call.1}
  #allocation0 [shape = 'u32[]', space=smem, size = 0x4, offset = 0x4, fixed_abs, tag = 'smem constant byte address 0x4 - core index']
  #allocation1 [shape = 'u32[144,128]{1,0:T(1,128)}', space=vmem, size = 0x12000, scoped, tag = 'internal scratch']
  %s0 = inlined_call_operand.hbm [shape: f32[16,16,32], index: 0, kind: input, shape index: {}]
  %s1 = inlined_call_operand.vmem [shape: f32[1,32], index: 1, kind: input, shape index: {}]
  %s2 = inlined_call_operand.hbm [shape: f32[16,256], index: 2, kind: output, shape index: {}]
  %s3 = sld [smem:[#allocation0]]
  $region45: #{tpu_custom_call.1} parent=0
    _
  %s5 = ssub.s32 1, %s3
  %s6 = scalar_select 0, %s5, %s3
  $region1: #{tpu_custom_call.1} parent=0
    #allocation2 [shape = 'u8[131072]{0}', space=vmem, size = 0x20000, scoped, tag = 'input window, operand 0']
    #allocation3 [shape = 's32[2]{0}', space=sflag, size = 0x8, scoped, tag = 'scoped memory for tpu_custom_call.1']
    #allocation4 [shape = 's32[2]{0}', space=sflag, size = 0x8, scoped, tag = 'scoped memory for tpu_custom_call.1']
    #allocation5 [shape = 'u8[16384]{0}', space=vmem, size = 0x4000, scoped, tag = 'output window, operand 0']
    %7 = vsyncpa [#allocation3], 0
    %s8 = scalar_lea.sflag [#allocation3], 1
    %9 = vsyncpa %s8, 0
    %10 = vsyncpa [#allocation4], 0
    %s11 = scalar_lea.sflag [#allocation4], 1
    %12 = vsyncpa %s11, 0
    loop: start=0, step=1, limit=4
    $region2: #{tpu_custom_call.1} parent=1 // loop_pre_header
      _
    $region3: #{tpu_custom_call.1} parent=1 // loop_header
      %s14 = sphi 0, %s18
      %p15 = scmp.ge.s32.totalorder %s14, 4
      %s24 = sphi 0, %s26
      %s27 = sphi 0, %s24
      %s28 = sphi 0, %s27
      %s44 = sphi 0, %s28
      %s48 = sphi 0, %s48
      %s50 = sphi 0, %s48
      %s51 = sphi 0, %s50
      %s65 = sphi 0, %s51
      %s71 = sphi 0, %s73
      %s74 = sphi 0, %s71
      %s75 = sphi 0, %s74
      %s91 = sphi 0, %s75
    $region4: #{tpu_custom_call.1} parent=1 // loop_header_branch
      %17 = sbr.rel (%p15) target = $region8
    $region5: #{tpu_custom_call.1} parent=1 // loop_body
      %s19 = ssub.s32 %s14, 1
      %s20 = ssub.s32 %s14, 2
      %s21 = sadd.s32 %s14, 1
      %s22 = ssub.s32 %s14, %s21
      %p23 = scmp.eq.s32.totalorder %s22, 0
      %s25 = sadd.s32 %s24, 1
      %s26 = scalar_select %p23, %s24, %s25
      %p29 = pneg %p23
      %p30 = scmp.eq.s32.totalorder %s14, 1
      %p31 = por %p29, %p30
      %p32 = scmp.ne.s32.totalorder %s24, %s27
      %p33 = scmp.eq.s32.totalorder %s14, 0
      %p34 = por %p32, %p33
      %p35 = scmp.ne.s32.totalorder %s24, %s27
      %p36 = scmp.eq.s32.totalorder %s19, 1
      %p37 = por %p35, %p36
      %p38 = scmp.ne.s32.totalorder %s27, %s28
      %p39 = scmp.eq.s32.totalorder %s19, 0
      %p40 = por %p38, %p39
      %p41 = scmp.ne.s32.totalorder %s27, %s28
      %p42 = scmp.eq.s32.totalorder %s20, 1
      %p43 = por %p41, %p42
      %p45 = scmp.ne.s32.totalorder %s28, %s44
      %p46 = scmp.eq.s32.totalorder %s20, 0
      %p47 = por %p45, %p46
      %s49 = sadd.s32 %s48, 1
      %p52 = scmp.eq.s32.totalorder %s14, 1
      %p53 = scmp.ne.s32.totalorder %s48, %s50
      %p54 = scmp.eq.s32.totalorder %s14, 0
      %p55 = por %p53, %p54
      %p56 = scmp.ne.s32.totalorder %s48, %s50
      %p57 = scmp.eq.s32.totalorder %s19, 1
      %p58 = por %p56, %p57
      %p59 = scmp.ne.s32.totalorder %s50, %s51
      %p60 = scmp.eq.s32.totalorder %s19, 0
      %p61 = por %p59, %p60
      %p62 = scmp.ne.s32.totalorder %s50, %s51
      %p63 = scmp.eq.s32.totalorder %s20, 1
      %p64 = por %p62, %p63
      %p66 = scmp.ne.s32.totalorder %s51, %s65
      %p67 = scmp.eq.s32.totalorder %s20, 0
      %p68 = por %p66, %p67
      %s69 = ssub.s32 %s14, %s21
      %p70 = scmp.eq.s32.totalorder %s69, 0
      %s72 = sadd.s32 %s71, 1
      %s73 = scalar_select %p70, %s71, %s72
      %p76 = pneg %p70
      %p77 = scmp.eq.s32.totalorder %s14, 1
      %p78 = por %p76, %p77
      %p79 = scmp.ne.s32.totalorder %s71, %s74
      %p80 = scmp.eq.s32.totalorder %s14, 0
      %p81 = por %p79, %p80
      %p82 = scmp.ne.s32.totalorder %s71, %s74
      %p83 = scmp.eq.s32.totalorder %s19, 1
      %p84 = por %p82, %p83
      %p85 = scmp.ne.s32.totalorder %s74, %s75
      %p86 = scmp.eq.s32.totalorder %s19, 0
      %p87 = por %p85, %p86
      %p88 = scmp.ne.s32.totalorder %s74, %s75
      %p89 = scmp.eq.s32.totalorder %s20, 1
      %p90 = por %p88, %p89
      %p92 = scmp.ne.s32.totalorder %s75, %s91
      %p93 = scmp.eq.s32.totalorder %s20, 0
      %p94 = por %p92, %p93
      %p95 = scmp.le.s32.totalorder 1, %s14
      %p96 = scmp.lt.s32.totalorder %s14, 3
      %p97 = pnand %p95, %p96
      %p98 = pneg %p97
      // Predicated region
      $region9: #{tpu_custom_call.1} parent=5 // pred_check
        _
      $region10: #{tpu_custom_call.1} parent=5 // pred_check_branch
        %100 = sbr.rel (%p97) target = $region12
      $region11: #{tpu_custom_call.1} parent=5 // pred_region
        %s101 = ssub.s32 %s14, 1
        // Predicated region
        $region13: #{tpu_custom_call.1} parent=11 // pred_check
          %p102 = pneg %p61
        $region14: #{tpu_custom_call.1} parent=11 // pred_check_branch
          %104 = sbr.rel (%p102) target = $region16
        $region15: #{tpu_custom_call.1} parent=11 // pred_region
          _
        $region16: #{tpu_custom_call.1} parent=11 // pred_fallthru
          _
      $region12: #{tpu_custom_call.1} parent=5 // pred_fallthru
        _
      %p105 = scmp.lt.s32.totalorder %s14, 2
      // Predicated region
      $region17: #{tpu_custom_call.1} parent=5 // pred_check
        %p106 = pneg %p105
      $region18: #{tpu_custom_call.1} parent=5 // pred_check_branch
        %108 = sbr.rel (%p106) target = $region20
      $region19: #{tpu_custom_call.1} parent=5 // pred_region
        // Predicated region
        $region21: #{tpu_custom_call.1} parent=19 // pred_check
          %p109 = pneg %p34
        $region22: #{tpu_custom_call.1} parent=19 // pred_check_branch
          %111 = sbr.rel (%p109) target = $region24
        $region23: #{tpu_custom_call.1} parent=19 // pred_region
          %s112 = sand.u32 %s24, 1
          %s113 = scalar_lea.sflag [#allocation3], %s112
          %s114 = sand.u32 %s24, 1
          %s115 = smul.addr %s114, 128
          %s116 = scalar_lea.vmem [#allocation2], %s115
          %s117 = smul.u32 8, %s14
          %s119 = ssub.s32 2048, 2048
          %120 = vsyncadd %s113, %s119
          %s121 = smul.addr %s117, 2
          %s122 = smul.addr %s121, 128
          %s123 = scalar_lea.hbm %s0, %s122
          %s124 = sshll.u32 %s116, 4
          %s125 = int_to_ptr.vmem [resolvable:$true] %s124
          %130 = dma.hbm_to_vmem [thread:$0]  %s123, 2048, %s125, %s113, 128, 128, 8
        $region24: #{tpu_custom_call.1} parent=19 // pred_fallthru
          _
      $region20: #{tpu_custom_call.1} parent=5 // pred_fallthru
        _
      %p131 = scmp.le.s32.totalorder 1, %s14
      %p132 = scmp.lt.s32.totalorder %s14, 3
      %p133 = pnand %p131, %p132
      %p134 = pneg %p133
      // Predicated region
      $region25: #{tpu_custom_call.1} parent=5 // pred_check
        _
      $region26: #{tpu_custom_call.1} parent=5 // pred_check_branch
        %136 = sbr.rel (%p133) target = $region28
      $region27: #{tpu_custom_call.1} parent=5 // pred_region
        %s137 = ssub.s32 %s14, 1
        %s138 = sand.u32 %s27, 1
        %s139 = scalar_lea.sflag [#allocation3], %s138
        %s140 = sand.u32 %s27, 1
        %s141 = smul.addr %s140, 128
        %s142 = scalar_lea.vmem [#allocation2], %s141
        // Predicated region
        $region29: #{tpu_custom_call.1} parent=27 // pred_check
          %p143 = pneg %p40
        $region30: #{tpu_custom_call.1} parent=27 // pred_check_branch
          %145 = sbr.rel (%p143) target = $region32
        $region31: #{tpu_custom_call.1} parent=27 // pred_region
          %146 = dma.done %s139, 2048
        $region32: #{tpu_custom_call.1} parent=27 // pred_fallthru
          _
        %s147 = sand.u32 %s27, 1
        %s148 = scalar_lea.sflag [#allocation3], %s147
        %s149 = sand.u32 %s27, 1
        %s150 = smul.addr %s149, 128
        %s151 = scalar_lea.vmem [#allocation2], %s150
        %p152 = pneg %p40
        %p153 = pneg %p37
        %p154 = pneg %p61
        %p155 = pneg %p58
        %p156 = pneg %p87
        %p157 = pneg %p84
        %s158 = sand.u32 %s74, 1
        %s159 = scalar_lea.sflag [#allocation4], %s158
        %s160 = sand.u32 %s74, 1
        %s161 = smul.addr %s160, 16
        %s162 = scalar_lea.vmem [#allocation5], %s161
        %s163 = smul.u32 8, %s19
        %v164 = vld [vmem:[%s142] sm:$0xff]
        %v165 = vld [vmem:[%s142 + $0x8] sm:$0xff]
        %v166 = vld [vmem:[%s142 + $0x10] sm:$0xff]
        %v167 = vld [vmem:[%s142 + $0x18] sm:$0xff]
        %v168 = vld [vmem:[%s142 + $0x20] sm:$0xff]
        %v169 = vld [vmem:[%s142 + $0x28] sm:$0xff]
        %v170 = vld [vmem:[%s142 + $0x30] sm:$0xff]
        %v171 = vld [vmem:[%s142 + $0x38] sm:$0xff]
        %v172 = vld [vmem:[%s142 + $0x40] sm:$0xff]
        %v173 = vld [vmem:[%s142 + $0x48] sm:$0xff]
        %v174 = vld [vmem:[%s142 + $0x50] sm:$0xff]
        %v175 = vld [vmem:[%s142 + $0x58] sm:$0xff]
        %v176 = vld [vmem:[%s142 + $0x60] sm:$0xff]
        %v177 = vld [vmem:[%s142 + $0x68] sm:$0xff]
        %v178 = vld [vmem:[%s142 + $0x70] sm:$0xff]
        %v179 = vld [vmem:[%s142 + $0x78] sm:$0xff]
        %v180 = vld [vmem:[%s1] sm:$0x1]
        %v182 = vlaneseq
        %v183 = vshrl.u32 %v182, 7
        %v184 = vsub.s32 0, %v183
        %v185 = vrot.slane %v180, %v184
        %v187 = vmul.f32 %v164, %v185
        %v188 = vmul.f32 %v165, %v185
        %v189 = vmul.f32 %v166, %v185
        %v190 = vmul.f32 %v167, %v185
        %v191 = vmul.f32 %v168, %v185
        %v192 = vmul.f32 %v169, %v185
        %v193 = vmul.f32 %v170, %v185
        %v194 = vmul.f32 %v171, %v185
        %v195 = vmul.f32 %v172, %v185
        %v196 = vmul.f32 %v173, %v185
        %v197 = vmul.f32 %v174, %v185
        %v198 = vmul.f32 %v175, %v185
        %v199 = vmul.f32 %v176, %v185
        %v200 = vmul.f32 %v177, %v185
        %v201 = vmul.f32 %v178, %v185
        %v202 = vmul.f32 %v179, %v185
        %vm203 = vcmask 261120
        %v204 = vsel %vm203, %v187, 0.0
        %205 = vadd.xlane.f32.xlu0 %v204
        %v206 = vpop.xlane.xlu0 %205
        %v207 = vsel %vm203, %v188, 0.0
        %208 = vadd.xlane.f32.xlu0 %v207
        %v209 = vpop.xlane.xlu0 %208
        %v210 = vsel %vm203, %v189, 0.0
        %211 = vadd.xlane.f32.xlu0 %v210
        %v212 = vpop.xlane.xlu0 %211
        %v213 = vsel %vm203, %v190, 0.0
        %214 = vadd.xlane.f32.xlu0 %v213
        %v215 = vpop.xlane.xlu0 %214
        %v216 = vsel %vm203, %v191, 0.0
        %217 = vadd.xlane.f32.xlu0 %v216
        %v218 = vpop.xlane.xlu0 %217
        %v219 = vsel %vm203, %v192, 0.0
        %220 = vadd.xlane.f32.xlu0 %v219
        %v221 = vpop.xlane.xlu0 %220
        %v222 = vsel %vm203, %v193, 0.0
        %223 = vadd.xlane.f32.xlu0 %v222
        %v224 = vpop.xlane.xlu0 %223
        %v225 = vsel %vm203, %v194, 0.0
        %226 = vadd.xlane.f32.xlu0 %v225
        %v227 = vpop.xlane.xlu0 %226
        %v228 = vsel %vm203, %v195, 0.0
        %229 = vadd.xlane.f32.xlu0 %v228
        %v230 = vpop.xlane.xlu0 %229
        %v231 = vsel %vm203, %v196, 0.0
        %232 = vadd.xlane.f32.xlu0 %v231
        %v233 = vpop.xlane.xlu0 %232
        %v234 = vsel %vm203, %v197, 0.0
        %235 = vadd.xlane.f32.xlu0 %v234
        %v236 = vpop.xlane.xlu0 %235
        %v237 = vsel %vm203, %v198, 0.0
        %238 = vadd.xlane.f32.xlu0 %v237
        %v239 = vpop.xlane.xlu0 %238
        %v240 = vsel %vm203, %v199, 0.0
        %241 = vadd.xlane.f32.xlu0 %v240
        %v242 = vpop.xlane.xlu0 %241
        %v243 = vsel %vm203, %v200, 0.0
        %244 = vadd.xlane.f32.xlu0 %v243
        %v245 = vpop.xlane.xlu0 %244
        %v246 = vsel %vm203, %v201, 0.0
        %247 = vadd.xlane.f32.xlu0 %v246
        %v248 = vpop.xlane.xlu0 %247
        %v249 = vsel %vm203, %v202, 0.0
        %250 = vadd.xlane.f32.xlu0 %v249
        %v251 = vpop.xlane.xlu0 %250
        %v252 = vsub.f32 %v164, %v206
        %v253 = vsub.f32 %v165, %v209
        %v254 = vsub.f32 %v166, %v212
        %v255 = vsub.f32 %v167, %v215
        %v256 = vsub.f32 %v168, %v218
        %v257 = vsub.f32 %v169, %v221
        %v258 = vsub.f32 %v170, %v224
        %v259 = vsub.f32 %v171, %v227
        %v260 = vsub.f32 %v172, %v230
        %v261 = vsub.f32 %v173, %v233
        %v262 = vsub.f32 %v174, %v236
        %v263 = vsub.f32 %v175, %v239
        %v264 = vsub.f32 %v176, %v242
        %v265 = vsub.f32 %v177, %v245
        %v266 = vsub.f32 %v178, %v248
        %v267 = vsub.f32 %v179, %v251
        %v269 = vsel %vm203, %v252, 0
        %v272 = vsel %vm203, %v253, 0
        %274 = vmatprep.subr.mxu0 0.0
        %275 = vmatpush1.xpose.msra.mxu0 %v269
        %276 = vmatprep.subr.mxu0 0.0
        %277 = vmatpush1.xpose.msra.mxu0 %v272
        %278 = vmatprep.subr.mxu0 0.0
        %279 = vmatpush1.xpose.msra.mxu0 0.0
        %280 = vmatprep.subr.mxu0 0.0
        %281 = vmatpush1.xpose.msra.mxu0 0.0
        %282 = vmatprep.subr.mxu0 0.0
        %283 = vmatpush1.xpose.msra.mxu0 0.0
        %284 = vmatprep.subr.mxu0 0.0
        %285 = vmatpush1.xpose.msra.mxu0 0.0
        %286 = vmatprep.subr.mxu0 0.0
        %287 = vmatpush1.xpose.msra.mxu0 0.0
        %288 = vmatprep.subr.mxu0 0.0
        %289 = vmatpush1.xpose.msra.mxu0 0.0
        %290 = vmatprep.subr.mxu0 0.0
        %291 = vmatpush1.xpose.msra.mxu0 0.0
        %292 = vmatprep.subr.mxu0 0.0
        %293 = vmatpush1.xpose.msra.mxu0 0.0
        %294 = vmatprep.subr.mxu0 0.0
        %295 = vmatpush1.xpose.msra.mxu0 0.0
        %296 = vmatprep.subr.mxu0 0.0
        %297 = vmatpush1.xpose.msra.mxu0 0.0
        %298 = vmatprep.subr.mxu0 0.0
        %299 = vmatpush1.xpose.msra.mxu0 0.0
        %300 = vmatprep.subr.mxu0 0.0
        %301 = vmatpush1.xpose.msra.mxu0 0.0
        %302 = vmatprep.subr.mxu0 0.0
        %303 = vmatpush1.xpose.msra.mxu0 0.0
        %304 = vmatprep.subr.mxu0 0.0
        %305 = vmatpush1.xpose.msra.mxu0 0.0
        %306 = vmatprep.subr.mxu0 0.0
        %307 = vmatpush1.xpose.msra.mxu0 0.0
        %308 = vmatprep.subr.mxu0 0.0
        %309 = vmatpush1.xpose.msra.mxu0 0.0
        %310 = vmatprep.subr.mxu0 0.0
        %311 = vmatpush1.xpose.msra.mxu0 0.0
        %312 = vmatprep.subr.mxu0 0.0
        %313 = vmatpush1.xpose.msra.mxu0 0.0
        %314 = vmatprep.subr.mxu0 0.0
        %315 = vmatpush1.xpose.msra.mxu0 0.0
        %316 = vmatprep.subr.mxu0 0.0
        %317 = vmatpush1.xpose.msra.mxu0 0.0
        %318 = vmatprep.subr.mxu0 0.0
        %319 = vmatpush1.xpose.msra.mxu0 0.0
        %320 = vmatprep.subr.mxu0 0.0
        %321 = vmatpush1.xpose.msra.mxu0 0.0
        %322 = vmatprep.subr.mxu0 0.0
        %323 = vmatpush1.xpose.msra.mxu0 0.0
        %324 = vmatprep.subr.mxu0 0.0
        %325 = vmatpush1.xpose.msra.mxu0 0.0
        %326 = vmatprep.subr.mxu0 0.0
        %327 = vmatpush1.xpose.msra.mxu0 0.0
        %328 = vmatprep.subr.mxu0 0.0
        %329 = vmatpush1.xpose.msra.mxu0 0.0
        %330 = vmatprep.subr.mxu0 0.0
        %331 = vmatpush1.xpose.msra.mxu0 0.0
        %332 = vmatprep.subr.mxu0 0.0
        %333 = vmatpush1.xpose.msra.mxu0 0.0
        %334 = vmatprep.subr.mxu0 0.0
        %335 = vmatpush1.xpose.msra.mxu0 0.0
        %336 = vmatprep.subr.mxu0 0.0
        %337 = vmatpush1.xpose.msra.mxu0 0.0
        %338 = vmatprep.mubr.f32.mxu0 0.0
        %339 = vmatmul.mubr.f32.gmra.mrb[0].mxu0 %v269
        %v340 = vpop.f32.mrb[0].mxu0
        %v341 = vadd.f32 0.0, %v340
        %v342 = vpop.f32.mrb[0].mxu0
        %343 = vmatprep.mubr.f32.mxu0 0.0
        %344 = vmatmul.mubr.f32.gmra.mrb[0].mxu0 %v272
        %v345 = vpop.f32.mrb[0].mxu0
        %v346 = vadd.f32 0.0, %v345
        %v347 = vpop.f32.mrb[0].mxu0
        %348 = vdwg.mxu0
        %v350 = vsel %vm203, %v254, 0
        %v353 = vsel %vm203, %v255, 0
        %355 = vmatprep.subr.mxu0 0.0
        %356 = vmatpush1.xpose.msra.mxu0 %v350
        %357 = vmatprep.subr.mxu0 0.0
        %358 = vmatpush1.xpose.msra.mxu0 %v353
        %359 = vmatprep.subr.mxu0 0.0
        %360 = vmatpush1.xpose.msra.mxu0 0.0
        %361 = vmatprep.subr.mxu0 0.0
        %362 = vmatpush1.xpose.msra.mxu0 0.0
        %363 = vmatprep.subr.mxu0 0.0
        %364 = vmatpush1.xpose.msra.mxu0 0.0
        %365 = vmatprep.subr.mxu0 0.0
        %366 = vmatpush1.xpose.msra.mxu0 0.0
        %367 = vmatprep.subr.mxu0 0.0
        %368 = vmatpush1.xpose.msra.mxu0 0.0
        %369 = vmatprep.subr.mxu0 0.0
        %370 = vmatpush1.xpose.msra.mxu0 0.0
        %371 = vmatprep.subr.mxu0 0.0
        %372 = vmatpush1.xpose.msra.mxu0 0.0
        %373 = vmatprep.subr.mxu0 0.0
        %374 = vmatpush1.xpose.msra.mxu0 0.0
        %375 = vmatprep.subr.mxu0 0.0
        %376 = vmatpush1.xpose.msra.mxu0 0.0
        %377 = vmatprep.subr.mxu0 0.0
        %378 = vmatpush1.xpose.msra.mxu0 0.0
        %379 = vmatprep.subr.mxu0 0.0
        %380 = vmatpush1.xpose.msra.mxu0 0.0
        %381 = vmatprep.subr.mxu0 0.0
        %382 = vmatpush1.xpose.msra.mxu0 0.0
        %383 = vmatprep.subr.mxu0 0.0
        %384 = vmatpush1.xpose.msra.mxu0 0.0
        %385 = vmatprep.subr.mxu0 0.0
        %386 = vmatpush1.xpose.msra.mxu0 0.0
        %387 = vmatprep.subr.mxu0 0.0
        %388 = vmatpush1.xpose.msra.mxu0 0.0
        %389 = vmatprep.subr.mxu0 0.0
        %390 = vmatpush1.xpose.msra.mxu0 0.0
        %391 = vmatprep.subr.mxu0 0.0
        %392 = vmatpush1.xpose.msra.mxu0 0.0
        %393 = vmatprep.subr.mxu0 0.0
        %394 = vmatpush1.xpose.msra.mxu0 0.0
        %395 = vmatprep.subr.mxu0 0.0
        %396 = vmatpush1.xpose.msra.mxu0 0.0
        %397 = vmatprep.subr.mxu0 0.0
        %398 = vmatpush1.xpose.msra.mxu0 0.0
        %399 = vmatprep.subr.mxu0 0.0
        %400 = vmatpush1.xpose.msra.mxu0 0.0
        %401 = vmatprep.subr.mxu0 0.0
        %402 = vmatpush1.xpose.msra.mxu0 0.0
        %403 = vmatprep.subr.mxu0 0.0
        %404 = vmatpush1.xpose.msra.mxu0 0.0
        %405 = vmatprep.subr.mxu0 0.0
        %406 = vmatpush1.xpose.msra.mxu0 0.0
        %407 = vmatprep.subr.mxu0 0.0
        %408 = vmatpush1.xpose.msra.mxu0 0.0
        %409 = vmatprep.subr.mxu0 0.0
        %410 = vmatpush1.xpose.msra.mxu0 0.0
        %411 = vmatprep.subr.mxu0 0.0
        %412 = vmatpush1.xpose.msra.mxu0 0.0
        %413 = vmatprep.subr.mxu0 0.0
        %414 = vmatpush1.xpose.msra.mxu0 0.0
        %415 = vmatprep.subr.mxu0 0.0
        %416 = vmatpush1.xpose.msra.mxu0 0.0
        %417 = vmatprep.subr.mxu0 0.0
        %418 = vmatpush1.xpose.msra.mxu0 0.0
        %419 = vmatprep.mubr.f32.mxu0 0.0
        %420 = vmatmul.mubr.f32.gmra.mrb[0].mxu0 %v350
        %v421 = vpop.f32.mrb[0].mxu0
        %v422 = vadd.f32 0.0, %v421
        %v423 = vpop.f32.mrb[0].mxu0
        %424 = vmatprep.mubr.f32.mxu0 0.0
        %425 = vmatmul.mubr.f32.gmra.mrb[0].mxu0 %v353
        %v426 = vpop.f32.mrb[0].mxu0
        %v427 = vadd.f32 0.0, %v426
        %v428 = vpop.f32.mrb[0].mxu0
        %429 = vdwg.mxu0
        %v431 = vsel %vm203, %v256, 0
        %v434 = vsel %vm203, %v257, 0
        %436 = vmatprep.subr.mxu0 0.0
        %437 = vmatpush1.xpose.msra.mxu0 %v431
        %438 = vmatprep.subr.mxu0 0.0
        %439 = vmatpush1.xpose.msra.mxu0 %v434
        %440 = vmatprep.subr.mxu0 0.0
        %441 = vmatpush1.xpose.msra.mxu0 0.0
        %442 = vmatprep.subr.mxu0 0.0
        %443 = vmatpush1.xpose.msra.mxu0 0.0
        %444 = vmatprep.subr.mxu0 0.0
        %445 = vmatpush1.xpose.msra.mxu0 0.0
        %446 = vmatprep.subr.mxu0 0.0
        %447 = vmatpush1.xpose.msra.mxu0 0.0
        %448 = vmatprep.subr.mxu0 0.0
        %449 = vmatpush1.xpose.msra.mxu0 0.0
        %450 = vmatprep.subr.mxu0 0.0
        %451 = vmatpush1.xpose.msra.mxu0 0.0
        %452 = vmatprep.subr.mxu0 0.0
        %453 = vmatpush1.xpose.msra.mxu0 0.0
        %454 = vmatprep.subr.mxu0 0.0
        %455 = vmatpush1.xpose.msra.mxu0 0.0
        %456 = vmatprep.subr.mxu0 0.0
        %457 = vmatpush1.xpose.msra.mxu0 0.0
        %458 = vmatprep.subr.mxu0 0.0
        %459 = vmatpush1.xpose.msra.mxu0 0.0
        %460 = vmatprep.subr.mxu0 0.0
        %461 = vmatpush1.xpose.msra.mxu0 0.0
        %462 = vmatprep.subr.mxu0 0.0
        %463 = vmatpush1.xpose.msra.mxu0 0.0
        %464 = vmatprep.subr.mxu0 0.0
        %465 = vmatpush1.xpose.msra.mxu0 0.0
        %466 = vmatprep.subr.mxu0 0.0
        %467 = vmatpush1.xpose.msra.mxu0 0.0
        %468 = vmatprep.subr.mxu0 0.0
        %469 = vmatpush1.xpose.msra.mxu0 0.0
        %470 = vmatprep.subr.mxu0 0.0
        %471 = vmatpush1.xpose.msra.mxu0 0.0
        %472 = vmatprep.subr.mxu0 0.0
        %473 = vmatpush1.xpose.msra.mxu0 0.0
        %474 = vmatprep.subr.mxu0 0.0
        %475 = vmatpush1.xpose.msra.mxu0 0.0
        %476 = vmatprep.subr.mxu0 0.0
        %477 = vmatpush1.xpose.msra.mxu0 0.0
        %478 = vmatprep.subr.mxu0 0.0
        %479 = vmatpush1.xpose.msra.mxu0 0.0
        %480 = vmatprep.subr.mxu0 0.0
        %481 = vmatpush1.xpose.msra.mxu0 0.0
        %482 = vmatprep.subr.mxu0 0.0
        %483 = vmatpush1.xpose.msra.mxu0 0.0
        %484 = vmatprep.subr.mxu0 0.0
        %485 = vmatpush1.xpose.msra.mxu0 0.0
        %486 = vmatprep.subr.mxu0 0.0
        %487 = vmatpush1.xpose.msra.mxu0 0.0
        %488 = vmatprep.subr.mxu0 0.0
        %489 = vmatpush1.xpose.msra.mxu0 0.0
        %490 = vmatprep.subr.mxu0 0.0
        %491 = vmatpush1.xpose.msra.mxu0 0.0
        %492 = vmatprep.subr.mxu0 0.0
        %493 = vmatpush1.xpose.msra.mxu0 0.0
        %494 = vmatprep.subr.mxu0 0.0
        %495 = vmatpush1.xpose.msra.mxu0 0.0
        %496 = vmatprep.subr.mxu0 0.0
        %497 = vmatpush1.xpose.msra.mxu0 0.0
        %498 = vmatprep.subr.mxu0 0.0
        %499 = vmatpush1.xpose.msra.mxu0 0.0
        %500 = vmatprep.mubr.f32.mxu0 0.0
        %501 = vmatmul.mubr.f32.gmra.mrb[0].mxu0 %v431
        %v502 = vpop.f32.mrb[0].mxu0
        %v503 = vadd.f32 0.0, %v502
        %v504 = vpop.f32.mrb[0].mxu0
        %505 = vmatprep.mubr.f32.mxu0 0.0
        %506 = vmatmul.mubr.f32.gmra.mrb[0].mxu0 %v434
        %v507 = vpop.f32.mrb[0].mxu0
        %v508 = vadd.f32 0.0, %v507
        %v509 = vpop.f32.mrb[0].mxu0
        %510 = vdwg.mxu0
        %v512 = vsel %vm203, %v258, 0
        %v515 = vsel %vm203, %v259, 0
        %517 = vmatprep.subr.mxu0 0.0
        %518 = vmatpush1.xpose.msra.mxu0 %v512
        %519 = vmatprep.subr.mxu0 0.0
        %520 = vmatpush1.xpose.msra.mxu0 %v515
        %521 = vmatprep.subr.mxu0 0.0
        %522 = vmatpush1.xpose.msra.mxu0 0.0
        %523 = vmatprep.subr.mxu0 0.0
        %524 = vmatpush1.xpose.msra.mxu0 0.0
        %525 = vmatprep.subr.mxu0 0.0
        %526 = vmatpush1.xpose.msra.mxu0 0.0
        %527 = vmatprep.subr.mxu0 0.0
        %528 = vmatpush1.xpose.msra.mxu0 0.0
        %529 = vmatprep.subr.mxu0 0.0
        %530 = vmatpush1.xpose.msra.mxu0 0.0
        %531 = vmatprep.subr.mxu0 0.0
        %532 = vmatpush1.xpose.msra.mxu0 0.0
        %533 = vmatprep.subr.mxu0 0.0
        %534 = vmatpush1.xpose.msra.mxu0 0.0
        %535 = vmatprep.subr.mxu0 0.0
        %536 = vmatpush1.xpose.msra.mxu0 0.0
        %537 = vmatprep.subr.mxu0 0.0
        %538 = vmatpush1.xpose.msra.mxu0 0.0
        %539 = vmatprep.subr.mxu0 0.0
        %540 = vmatpush1.xpose.msra.mxu0 0.0
        %541 = vmatprep.subr.mxu0 0.0
        %542 = vmatpush1.xpose.msra.mxu0 0.0
        %543 = vmatprep.subr.mxu0 0.0
        %544 = vmatpush1.xpose.msra.mxu0 0.0
        %545 = vmatprep.subr.mxu0 0.0
        %546 = vmatpush1.xpose.msra.mxu0 0.0
        %547 = vmatprep.subr.mxu0 0.0
        %548 = vmatpush1.xpose.msra.mxu0 0.0
        %549 = vmatprep.subr.mxu0 0.0
        %550 = vmatpush1.xpose.msra.mxu0 0.0
        %551 = vmatprep.subr.mxu0 0.0
        %552 = vmatpush1.xpose.msra.mxu0 0.0
        %553 = vmatprep.subr.mxu0 0.0
        %554 = vmatpush1.xpose.msra.mxu0 0.0
        %555 = vmatprep.subr.mxu0 0.0
        %556 = vmatpush1.xpose.msra.mxu0 0.0
        %557 = vmatprep.subr.mxu0 0.0
        %558 = vmatpush1.xpose.msra.mxu0 0.0
        %559 = vmatprep.subr.mxu0 0.0
        %560 = vmatpush1.xpose.msra.mxu0 0.0
        %561 = vmatprep.subr.mxu0 0.0
        %562 = vmatpush1.xpose.msra.mxu0 0.0
        %563 = vmatprep.subr.mxu0 0.0
        %564 = vmatpush1.xpose.msra.mxu0 0.0
        %565 = vmatprep.subr.mxu0 0.0
        %566 = vmatpush1.xpose.msra.mxu0 0.0
        %567 = vmatprep.subr.mxu0 0.0
        %568 = vmatpush1.xpose.msra.mxu0 0.0
        %569 = vmatprep.subr.mxu0 0.0
        %570 = vmatpush1.xpose.msra.mxu0 0.0
        %571 = vmatprep.subr.mxu0 0.0
        %572 = vmatpush1.xpose.msra.mxu0 0.0
        %573 = vmatprep.subr.mxu0 0.0
        %574 = vmatpush1.xpose.msra.mxu0 0.0
        %575 = vmatprep.subr.mxu0 0.0
        %576 = vmatpush1.xpose.msra.mxu0 0.0
        %577 = vmatprep.subr.mxu0 0.0
        %578 = vmatpush1.xpose.msra.mxu0 0.0
        %579 = vmatprep.subr.mxu0 0.0
        %580 = vmatpush1.xpose.msra.mxu0 0.0
        %581 = vmatprep.mubr.f32.mxu0 0.0
        %582 = vmatmul.mubr.f32.gmra.mrb[0].mxu0 %v512
        %v583 = vpop.f32.mrb[0].mxu0
        %v584 = vadd.f32 0.0, %v583
        %v585 = vpop.f32.mrb[0].mxu0
        %586 = vmatprep.mubr.f32.mxu0 0.0
        %587 = vmatmul.mubr.f32.gmra.mrb[0].mxu0 %v515
        %v588 = vpop.f32.mrb[0].mxu0
        %v589 = vadd.f32 0.0, %v588
        %v590 = vpop.f32.mrb[0].mxu0
        %591 = vdwg.mxu0
        %v593 = vsel %vm203, %v260, 0
        %v596 = vsel %vm203, %v261, 0
        %598 = vmatprep.subr.mxu0 0.0
        %599 = vmatpush1.xpose.msra.mxu0 %v593
        %600 = vmatprep.subr.mxu0 0.0
        %601 = vmatpush1.xpose.msra.mxu0 %v596
        %602 = vmatprep.subr.mxu0 0.0
        %603 = vmatpush1.xpose.msra.mxu0 0.0
        %604 = vmatprep.subr.mxu0 0.0
        %605 = vmatpush1.xpose.msra.mxu0 0.0
        %606 = vmatprep.subr.mxu0 0.0
        %607 = vmatpush1.xpose.msra.mxu0 0.0
        %608 = vmatprep.subr.mxu0 0.0
        %609 = vmatpush1.xpose.msra.mxu0 0.0
        %610 = vmatprep.subr.mxu0 0.0
        %611 = vmatpush1.xpose.msra.mxu0 0.0
        %612 = vmatprep.subr.mxu0 0.0
        %613 = vmatpush1.xpose.msra.mxu0 0.0
        %614 = vmatprep.subr.mxu0 0.0
        %615 = vmatpush1.xpose.msra.mxu0 0.0
        %616 = vmatprep.subr.mxu0 0.0
        %617 = vmatpush1.xpose.msra.mxu0 0.0
        %618 = vmatprep.subr.mxu0 0.0
        %619 = vmatpush1.xpose.msra.mxu0 0.0
        %620 = vmatprep.subr.mxu0 0.0
        %621 = vmatpush1.xpose.msra.mxu0 0.0
        %622 = vmatprep.subr.mxu0 0.0
        %623 = vmatpush1.xpose.msra.mxu0 0.0
        %624 = vmatprep.subr.mxu0 0.0
        %625 = vmatpush1.xpose.msra.mxu0 0.0
        %626 = vmatprep.subr.mxu0 0.0
        %627 = vmatpush1.xpose.msra.mxu0 0.0
        %628 = vmatprep.subr.mxu0 0.0
        %629 = vmatpush1.xpose.msra.mxu0 0.0
        %630 = vmatprep.subr.mxu0 0.0
        %631 = vmatpush1.xpose.msra.mxu0 0.0
        %632 = vmatprep.subr.mxu0 0.0
        %633 = vmatpush1.xpose.msra.mxu0 0.0
        %634 = vmatprep.subr.mxu0 0.0
        %635 = vmatpush1.xpose.msra.mxu0 0.0
        %636 = vmatprep.subr.mxu0 0.0
        %637 = vmatpush1.xpose.msra.mxu0 0.0
        %638 = vmatprep.subr.mxu0 0.0
        %639 = vmatpush1.xpose.msra.mxu0 0.0
        %640 = vmatprep.subr.mxu0 0.0
        %641 = vmatpush1.xpose.msra.mxu0 0.0
        %642 = vmatprep.subr.mxu0 0.0
        %643 = vmatpush1.xpose.msra.mxu0 0.0
        %644 = vmatprep.subr.mxu0 0.0
        %645 = vmatpush1.xpose.msra.mxu0 0.0
        %646 = vmatprep.subr.mxu0 0.0
        %647 = vmatpush1.xpose.msra.mxu0 0.0
        %648 = vmatprep.subr.mxu0 0.0
        %649 = vmatpush1.xpose.msra.mxu0 0.0
        %650 = vmatprep.subr.mxu0 0.0
        %651 = vmatpush1.xpose.msra.mxu0 0.0
        %652 = vmatprep.subr.mxu0 0.0
        %653 = vmatpush1.xpose.msra.mxu0 0.0
        %654 = vmatprep.subr.mxu0 0.0
        %655 = vmatpush1.xpose.msra.mxu0 0.0
        %656 = vmatprep.subr.mxu0 0.0
        %657 = vmatpush1.xpose.msra.mxu0 0.0
        %658 = vmatprep.subr.mxu0 0.0
        %659 = vmatpush1.xpose.msra.mxu0 0.0
        %660 = vmatprep.subr.mxu0 0.0
        %661 = vmatpush1.xpose.msra.mxu0 0.0
        %662 = vmatprep.mubr.f32.mxu0 0.0
        %663 = vmatmul.mubr.f32.gmra.mrb[0].mxu0 %v593
        %v664 = vpop.f32.mrb[0].mxu0
        %v665 = vadd.f32 0.0, %v664
        %v666 = vpop.f32.mrb[0].mxu0
        %667 = vmatprep.mubr.f32.mxu0 0.0
        %668 = vmatmul.mubr.f32.gmra.mrb[0].mxu0 %v596
        %v669 = vpop.f32.mrb[0].mxu0
        %v670 = vadd.f32 0.0, %v669
        %v671 = vpop.f32.mrb[0].mxu0
        %672 = vdwg.mxu0
        %v674 = vsel %vm203, %v262, 0
        %v677 = vsel %vm203, %v263, 0
        %679 = vmatprep.subr.mxu0 0.0
        %680 = vmatpush1.xpose.msra.mxu0 %v674
        %681 = vmatprep.subr.mxu0 0.0
        %682 = vmatpush1.xpose.msra.mxu0 %v677
        %683 = vmatprep.subr.mxu0 0.0
        %684 = vmatpush1.xpose.msra.mxu0 0.0
        %685 = vmatprep.subr.mxu0 0.0
        %686 = vmatpush1.xpose.msra.mxu0 0.0
        %687 = vmatprep.subr.mxu0 0.0
        %688 = vmatpush1.xpose.msra.mxu0 0.0
        %689 = vmatprep.subr.mxu0 0.0
        %690 = vmatpush1.xpose.msra.mxu0 0.0
        %691 = vmatprep.subr.mxu0 0.0
        %692 = vmatpush1.xpose.msra.mxu0 0.0
        %693 = vmatprep.subr.mxu0 0.0
        %694 = vmatpush1.xpose.msra.mxu0 0.0
        %695 = vmatprep.subr.mxu0 0.0
        %696 = vmatpush1.xpose.msra.mxu0 0.0
        %697 = vmatprep.subr.mxu0 0.0
        %698 = vmatpush1.xpose.msra.mxu0 0.0
        %699 = vmatprep.subr.mxu0 0.0
        %700 = vmatpush1.xpose.msra.mxu0 0.0
        %701 = vmatprep.subr.mxu0 0.0
        %702 = vmatpush1.xpose.msra.mxu0 0.0
        %703 = vmatprep.subr.mxu0 0.0
        %704 = vmatpush1.xpose.msra.mxu0 0.0
        %705 = vmatprep.subr.mxu0 0.0
        %706 = vmatpush1.xpose.msra.mxu0 0.0
        %707 = vmatprep.subr.mxu0 0.0
        %708 = vmatpush1.xpose.msra.mxu0 0.0
        %709 = vmatprep.subr.mxu0 0.0
        %710 = vmatpush1.xpose.msra.mxu0 0.0
        %711 = vmatprep.subr.mxu0 0.0
        %712 = vmatpush1.xpose.msra.mxu0 0.0
        %713 = vmatprep.subr.mxu0 0.0
        %714 = vmatpush1.xpose.msra.mxu0 0.0
        %715 = vmatprep.subr.mxu0 0.0
        %716 = vmatpush1.xpose.msra.mxu0 0.0
        %717 = vmatprep.subr.mxu0 0.0
        %718 = vmatpush1.xpose.msra.mxu0 0.0
        %719 = vmatprep.subr.mxu0 0.0
        %720 = vmatpush1.xpose.msra.mxu0 0.0
        %721 = vmatprep.subr.mxu0 0.0
        %722 = vmatpush1.xpose.msra.mxu0 0.0
        %723 = vmatprep.subr.mxu0 0.0
        %724 = vmatpush1.xpose.msra.mxu0 0.0
        %725 = vmatprep.subr.mxu0 0.0
        %726 = vmatpush1.xpose.msra.mxu0 0.0
        %727 = vmatprep.subr.mxu0 0.0
        %728 = vmatpush1.xpose.msra.mxu0 0.0
        %729 = vmatprep.subr.mxu0 0.0
        %730 = vmatpush1.xpose.msra.mxu0 0.0
        %731 = vmatprep.subr.mxu0 0.0
        %732 = vmatpush1.xpose.msra.mxu0 0.0
        %733 = vmatprep.subr.mxu0 0.0
        %734 = vmatpush1.xpose.msra.mxu0 0.0
        %735 = vmatprep.subr.mxu0 0.0
        %736 = vmatpush1.xpose.msra.mxu0 0.0
        %737 = vmatprep.subr.mxu0 0.0
        %738 = vmatpush1.xpose.msra.mxu0 0.0
        %739 = vmatprep.subr.mxu0 0.0
        %740 = vmatpush1.xpose.msra.mxu0 0.0
        %741 = vmatprep.subr.mxu0 0.0
        %742 = vmatpush1.xpose.msra.mxu0 0.0
        %743 = vmatprep.mubr.f32.mxu0 0.0
        %744 = vmatmul.mubr.f32.gmra.mrb[0].mxu0 %v674
        %v745 = vpop.f32.mrb[0].mxu0
        %v746 = vadd.f32 0.0, %v745
        %v747 = vpop.f32.mrb[0].mxu0
        %748 = vmatprep.mubr.f32.mxu0 0.0
        %749 = vmatmul.mubr.f32.gmra.mrb[0].mxu0 %v677
        %v750 = vpop.f32.mrb[0].mxu0
        %v751 = vadd.f32 0.0, %v750
        %v752 = vpop.f32.mrb[0].mxu0
        %753 = vdwg.mxu0
        %v755 = vsel %vm203, %v264, 0
        %v758 = vsel %vm203, %v265, 0
        %760 = vmatprep.subr.mxu0 0.0
        %761 = vmatpush1.xpose.msra.mxu0 %v755
        %762 = vmatprep.subr.mxu0 0.0
        %763 = vmatpush1.xpose.msra.mxu0 %v758
        %764 = vmatprep.subr.mxu0 0.0
        %765 = vmatpush1.xpose.msra.mxu0 0.0
        %766 = vmatprep.subr.mxu0 0.0
        %767 = vmatpush1.xpose.msra.mxu0 0.0
        %768 = vmatprep.subr.mxu0 0.0
        %769 = vmatpush1.xpose.msra.mxu0 0.0
        %770 = vmatprep.subr.mxu0 0.0
        %771 = vmatpush1.xpose.msra.mxu0 0.0
        %772 = vmatprep.subr.mxu0 0.0
        %773 = vmatpush1.xpose.msra.mxu0 0.0
        %774 = vmatprep.subr.mxu0 0.0
        %775 = vmatpush1.xpose.msra.mxu0 0.0
        %776 = vmatprep.subr.mxu0 0.0
        %777 = vmatpush1.xpose.msra.mxu0 0.0
        %778 = vmatprep.subr.mxu0 0.0
        %779 = vmatpush1.xpose.msra.mxu0 0.0
        %780 = vmatprep.subr.mxu0 0.0
        %781 = vmatpush1.xpose.msra.mxu0 0.0
        %782 = vmatprep.subr.mxu0 0.0
        %783 = vmatpush1.xpose.msra.mxu0 0.0
        %784 = vmatprep.subr.mxu0 0.0
        %785 = vmatpush1.xpose.msra.mxu0 0.0
        %786 = vmatprep.subr.mxu0 0.0
        %787 = vmatpush1.xpose.msra.mxu0 0.0
        %788 = vmatprep.subr.mxu0 0.0
        %789 = vmatpush1.xpose.msra.mxu0 0.0
        %790 = vmatprep.subr.mxu0 0.0
        %791 = vmatpush1.xpose.msra.mxu0 0.0
        %792 = vmatprep.subr.mxu0 0.0
        %793 = vmatpush1.xpose.msra.mxu0 0.0
        %794 = vmatprep.subr.mxu0 0.0
        %795 = vmatpush1.xpose.msra.mxu0 0.0
        %796 = vmatprep.subr.mxu0 0.0
        %797 = vmatpush1.xpose.msra.mxu0 0.0
        %798 = vmatprep.subr.mxu0 0.0
        %799 = vmatpush1.xpose.msra.mxu0 0.0
        %800 = vmatprep.subr.mxu0 0.0
        %801 = vmatpush1.xpose.msra.mxu0 0.0
        %802 = vmatprep.subr.mxu0 0.0
        %803 = vmatpush1.xpose.msra.mxu0 0.0
        %804 = vmatprep.subr.mxu0 0.0
        %805 = vmatpush1.xpose.msra.mxu0 0.0
        %806 = vmatprep.subr.mxu0 0.0
        %807 = vmatpush1.xpose.msra.mxu0 0.0
        %808 = vmatprep.subr.mxu0 0.0
        %809 = vmatpush1.xpose.msra.mxu0 0.0
        %810 = vmatprep.subr.mxu0 0.0
        %811 = vmatpush1.xpose.msra.mxu0 0.0
        %812 = vmatprep.subr.mxu0 0.0
        %813 = vmatpush1.xpose.msra.mxu0 0.0
        %814 = vmatprep.subr.mxu0 0.0
        %815 = vmatpush1.xpose.msra.mxu0 0.0
        %816 = vmatprep.subr.mxu0 0.0
        %817 = vmatpush1.xpose.msra.mxu0 0.0
        %818 = vmatprep.subr.mxu0 0.0
        %819 = vmatpush1.xpose.msra.mxu0 0.0
        %820 = vmatprep.subr.mxu0 0.0
        %821 = vmatpush1.xpose.msra.mxu0 0.0
        %822 = vmatprep.subr.mxu0 0.0
        %823 = vmatpush1.xpose.msra.mxu0 0.0
        %824 = vmatprep.mubr.f32.mxu0 0.0
        %825 = vmatmul.mubr.f32.gmra.mrb[0].mxu0 %v755
        %v826 = vpop.f32.mrb[0].mxu0
        %v827 = vadd.f32 0.0, %v826
        %v828 = vpop.f32.mrb[0].mxu0
        %829 = vmatprep.mubr.f32.mxu0 0.0
        %830 = vmatmul.mubr.f32.gmra.mrb[0].mxu0 %v758
        %v831 = vpop.f32.mrb[0].mxu0
        %v832 = vadd.f32 0.0, %v831
        %v833 = vpop.f32.mrb[0].mxu0
        %834 = vdwg.mxu0
        %v836 = vsel %vm203, %v266, 0
        %v839 = vsel %vm203, %v267, 0
        %841 = vmatprep.subr.mxu0 0.0
        %842 = vmatpush1.xpose.msra.mxu0 %v836
        %843 = vmatprep.subr.mxu0 0.0
        %844 = vmatpush1.xpose.msra.mxu0 %v839
        %845 = vmatprep.subr.mxu0 0.0
        %846 = vmatpush1.xpose.msra.mxu0 0.0
        %847 = vmatprep.subr.mxu0 0.0
        %848 = vmatpush1.xpose.msra.mxu0 0.0
        %849 = vmatprep.subr.mxu0 0.0
        %850 = vmatpush1.xpose.msra.mxu0 0.0
        %851 = vmatprep.subr.mxu0 0.0
        %852 = vmatpush1.xpose.msra.mxu0 0.0
        %853 = vmatprep.subr.mxu0 0.0
        %854 = vmatpush1.xpose.msra.mxu0 0.0
        %855 = vmatprep.subr.mxu0 0.0
        %856 = vmatpush1.xpose.msra.mxu0 0.0
        %857 = vmatprep.subr.mxu0 0.0
        %858 = vmatpush1.xpose.msra.mxu0 0.0
        %859 = vmatprep.subr.mxu0 0.0
        %860 = vmatpush1.xpose.msra.mxu0 0.0
        %861 = vmatprep.subr.mxu0 0.0
        %862 = vmatpush1.xpose.msra.mxu0 0.0
        %863 = vmatprep.subr.mxu0 0.0
        %864 = vmatpush1.xpose.msra.mxu0 0.0
        %865 = vmatprep.subr.mxu0 0.0
        %866 = vmatpush1.xpose.msra.mxu0 0.0
        %867 = vmatprep.subr.mxu0 0.0
        %868 = vmatpush1.xpose.msra.mxu0 0.0
        %869 = vmatprep.subr.mxu0 0.0
        %870 = vmatpush1.xpose.msra.mxu0 0.0
        %871 = vmatprep.subr.mxu0 0.0
        %872 = vmatpush1.xpose.msra.mxu0 0.0
        %873 = vmatprep.subr.mxu0 0.0
        %874 = vmatpush1.xpose.msra.mxu0 0.0
        %875 = vmatprep.subr.mxu0 0.0
        %876 = vmatpush1.xpose.msra.mxu0 0.0
        %877 = vmatprep.subr.mxu0 0.0
        %878 = vmatpush1.xpose.msra.mxu0 0.0
        %879 = vmatprep.subr.mxu0 0.0
        %880 = vmatpush1.xpose.msra.mxu0 0.0
        %881 = vmatprep.subr.mxu0 0.0
        %882 = vmatpush1.xpose.msra.mxu0 0.0
        %883 = vmatprep.subr.mxu0 0.0
        %884 = vmatpush1.xpose.msra.mxu0 0.0
        %885 = vmatprep.subr.mxu0 0.0
        %886 = vmatpush1.xpose.msra.mxu0 0.0
        %887 = vmatprep.subr.mxu0 0.0
        %888 = vmatpush1.xpose.msra.mxu0 0.0
        %889 = vmatprep.subr.mxu0 0.0
        %890 = vmatpush1.xpose.msra.mxu0 0.0
        %891 = vmatprep.subr.mxu0 0.0
        %892 = vmatpush1.xpose.msra.mxu0 0.0
        %893 = vmatprep.subr.mxu0 0.0
        %894 = vmatpush1.xpose.msra.mxu0 0.0
        %895 = vmatprep.subr.mxu0 0.0
        %896 = vmatpush1.xpose.msra.mxu0 0.0
        %897 = vmatprep.subr.mxu0 0.0
        %898 = vmatpush1.xpose.msra.mxu0 0.0
        %899 = vmatprep.subr.mxu0 0.0
        %900 = vmatpush1.xpose.msra.mxu0 0.0
        %901 = vmatprep.subr.mxu0 0.0
        %902 = vmatpush1.xpose.msra.mxu0 0.0
        %903 = vmatprep.subr.mxu0 0.0
        %904 = vmatpush1.xpose.msra.mxu0 0.0
        %905 = vmatprep.mubr.f32.mxu0 0.0
        %906 = vmatmul.mubr.f32.gmra.mrb[0].mxu0 %v836
        %v907 = vpop.f32.mrb[0].mxu0
        %v908 = vadd.f32 0.0, %v907
        %v909 = vpop.f32.mrb[0].mxu0
        %910 = vmatprep.mubr.f32.mxu0 0.0
        %911 = vmatmul.mubr.f32.gmra.mrb[0].mxu0 %v839
        %v912 = vpop.f32.mrb[0].mxu0
        %v913 = vadd.f32 0.0, %v912
        %v914 = vpop.f32.mrb[0].mxu0
        %915 = vdwg.mxu0
        %v916 = vmul.f32 %v341, 0.03125
        %v917 = vmul.f32 %v346, 0.03125
        %v918 = vmul.f32 %v422, 0.03125
        %v919 = vmul.f32 %v427, 0.03125
        %v920 = vmul.f32 %v503, 0.03125
        %v921 = vmul.f32 %v508, 0.03125
        %v922 = vmul.f32 %v584, 0.03125
        %v923 = vmul.f32 %v589, 0.03125
        %v924 = vmul.f32 %v665, 0.03125
        %v925 = vmul.f32 %v670, 0.03125
        %v926 = vmul.f32 %v746, 0.03125
        %v927 = vmul.f32 %v751, 0.03125
        %v928 = vmul.f32 %v827, 0.03125
        %v929 = vmul.f32 %v832, 0.03125
        %v930 = vmul.f32 %v908, 0.03125
        %v931 = vmul.f32 %v913, 0.03125
        %v932 = vcombine.low %v916, %v920
        %v933 = vcombine.high %v916, %v920
        %v935 = vunpack.c.l.s4 1983009808
        %v936 = vunpack.c.0.s8 %v935
        %v937 = vlaneseq
        %v938 = vshrl.u32 %v937, 7
        %v939 = vsub.s32 %v936, %v938
        %v940 = vrot.slane %v932, %v939
        %v942 = vunpack.c.l.s4 1983009808
        %v943 = vunpack.c.0.s8 %v942
        %v944 = vlaneseq
        %v945 = vshrl.u32 %v944, 7
        %v946 = vsub.s32 %v943, %v945
        %v947 = vrot.slane %v933, %v946
        %v948 = vcombine.low %v918, %v922
        %v949 = vcombine.high %v918, %v922
        %v951 = vunpack.c.l.s4 1983009808
        %v952 = vunpack.c.0.s8 %v951
        %v953 = vlaneseq
        %v954 = vshrl.u32 %v953, 7
        %v955 = vsub.s32 %v952, %v954
        %v956 = vrot.slane %v948, %v955
        %v958 = vunpack.c.l.s4 1983009808
        %v959 = vunpack.c.0.s8 %v958
        %v960 = vlaneseq
        %v961 = vshrl.u32 %v960, 7
        %v962 = vsub.s32 %v959, %v961
        %v963 = vrot.slane %v949, %v962
        %v964 = vcombine.low %v924, %v928
        %v965 = vcombine.high %v924, %v928
        %v967 = vunpack.c.l.s4 1983009808
        %v968 = vunpack.c.0.s8 %v967
        %v969 = vlaneseq
        %v970 = vshrl.u32 %v969, 7
        %v971 = vsub.s32 %v968, %v970
        %v972 = vrot.slane %v964, %v971
        %v974 = vunpack.c.l.s4 1983009808
        %v975 = vunpack.c.0.s8 %v974
        %v976 = vlaneseq
        %v977 = vshrl.u32 %v976, 7
        %v978 = vsub.s32 %v975, %v977
        %v979 = vrot.slane %v965, %v978
        %v980 = vcombine.low %v926, %v930
        %v981 = vcombine.high %v926, %v930
        %v983 = vunpack.c.l.s4 1983009808
        %v984 = vunpack.c.0.s8 %v983
        %v985 = vlaneseq
        %v986 = vshrl.u32 %v985, 7
        %v987 = vsub.s32 %v984, %v986
        %v988 = vrot.slane %v980, %v987
        %v990 = vunpack.c.l.s4 1983009808
        %v991 = vunpack.c.0.s8 %v990
        %v992 = vlaneseq
        %v993 = vshrl.u32 %v992, 7
        %v994 = vsub.s32 %v991, %v993
        %v995 = vrot.slane %v981, %v994
        %v996 = vcombine.low %v940, %v956
        %v997 = vcombine.high %v940, %v956
        %v999 = vunpack.c.l.s4 1934713408
        %v1000 = vunpack.c.0.s8 %v999
        %v1001 = vlaneseq
        %v1002 = vshrl.u32 %v1001, 7
        %v1003 = vsub.s32 %v1000, %v1002
        %v1004 = vrot.slane %v996, %v1003
        %v1006 = vunpack.c.l.s4 1934713408
        %v1007 = vunpack.c.0.s8 %v1006
        %v1008 = vlaneseq
        %v1009 = vshrl.u32 %v1008, 7
        %v1010 = vsub.s32 %v1007, %v1009
        %v1011 = vrot.slane %v997, %v1010
        %v1012 = vcombine.low %v947, %v963
        %v1013 = vcombine.high %v947, %v963
        %v1015 = vunpack.c.l.s4 1934713408
        %v1016 = vunpack.c.0.s8 %v1015
        %v1017 = vlaneseq
        %v1018 = vshrl.u32 %v1017, 7
        %v1019 = vsub.s32 %v1016, %v1018
        %v1020 = vrot.slane %v1012, %v1019
        %v1022 = vunpack.c.l.s4 1934713408
        %v1023 = vunpack.c.0.s8 %v1022
        %v1024 = vlaneseq
        %v1025 = vshrl.u32 %v1024, 7
        %v1026 = vsub.s32 %v1023, %v1025
        %v1027 = vrot.slane %v1013, %v1026
        %v1028 = vcombine.low %v972, %v988
        %v1029 = vcombine.high %v972, %v988
        %v1031 = vunpack.c.l.s4 1934713408
        %v1032 = vunpack.c.0.s8 %v1031
        %v1033 = vlaneseq
        %v1034 = vshrl.u32 %v1033, 7
        %v1035 = vsub.s32 %v1032, %v1034
        %v1036 = vrot.slane %v1028, %v1035
        %v1038 = vunpack.c.l.s4 1934713408
        %v1039 = vunpack.c.0.s8 %v1038
        %v1040 = vlaneseq
        %v1041 = vshrl.u32 %v1040, 7
        %v1042 = vsub.s32 %v1039, %v1041
        %v1043 = vrot.slane %v1029, %v1042
        %v1044 = vcombine.low %v979, %v995
        %v1045 = vcombine.high %v979, %v995
        %v1047 = vunpack.c.l.s4 1934713408
        %v1048 = vunpack.c.0.s8 %v1047
        %v1049 = vlaneseq
        %v1050 = vshrl.u32 %v1049, 7
        %v1051 = vsub.s32 %v1048, %v1050
        %v1052 = vrot.slane %v1044, %v1051
        %v1054 = vunpack.c.l.s4 1934713408
        %v1055 = vunpack.c.0.s8 %v1054
        %v1056 = vlaneseq
        %v1057 = vshrl.u32 %v1056, 7
        %v1058 = vsub.s32 %v1055, %v1057
        %v1059 = vrot.slane %v1045, %v1058
        %v1060 = vcombine.low %v1004, %v1036
        %v1061 = vcombine.high %v1004, %v1036
        %v1062 = vcombine.low %v1011, %v1043
        %v1063 = vcombine.high %v1011, %v1043
        %v1064 = vcombine.low %v1020, %v1052
        %v1065 = vcombine.high %v1020, %v1052
        %v1066 = vcombine.low %v1027, %v1059
        %v1067 = vcombine.high %v1027, %v1059
        %v1068 = vcombine.low %v917, %v921
        %v1069 = vcombine.high %v917, %v921
        %v1071 = vunpack.c.l.s4 1983009808
        %v1072 = vunpack.c.0.s8 %v1071
        %v1073 = vlaneseq
        %v1074 = vshrl.u32 %v1073, 7
        %v1075 = vsub.s32 %v1072, %v1074
        %v1076 = vrot.slane %v1068, %v1075
        %v1078 = vunpack.c.l.s4 1983009808
        %v1079 = vunpack.c.0.s8 %v1078
        %v1080 = vlaneseq
        %v1081 = vshrl.u32 %v1080, 7
        %v1082 = vsub.s32 %v1079, %v1081
        %v1083 = vrot.slane %v1069, %v1082
        %v1084 = vcombine.low %v919, %v923
        %v1085 = vcombine.high %v919, %v923
        %v1087 = vunpack.c.l.s4 1983009808
        %v1088 = vunpack.c.0.s8 %v1087
        %v1089 = vlaneseq
        %v1090 = vshrl.u32 %v1089, 7
        %v1091 = vsub.s32 %v1088, %v1090
        %v1092 = vrot.slane %v1084, %v1091
        %v1094 = vunpack.c.l.s4 1983009808
        %v1095 = vunpack.c.0.s8 %v1094
        %v1096 = vlaneseq
        %v1097 = vshrl.u32 %v1096, 7
        %v1098 = vsub.s32 %v1095, %v1097
        %v1099 = vrot.slane %v1085, %v1098
        %v1100 = vcombine.low %v925, %v929
        %v1101 = vcombine.high %v925, %v929
        %v1103 = vunpack.c.l.s4 1983009808
        %v1104 = vunpack.c.0.s8 %v1103
        %v1105 = vlaneseq
        %v1106 = vshrl.u32 %v1105, 7
        %v1107 = vsub.s32 %v1104, %v1106
        %v1108 = vrot.slane %v1100, %v1107
        %v1110 = vunpack.c.l.s4 1983009808
        %v1111 = vunpack.c.0.s8 %v1110
        %v1112 = vlaneseq
        %v1113 = vshrl.u32 %v1112, 7
        %v1114 = vsub.s32 %v1111, %v1113
        %v1115 = vrot.slane %v1101, %v1114
        %v1116 = vcombine.low %v927, %v931
        %v1117 = vcombine.high %v927, %v931
        %v1119 = vunpack.c.l.s4 1983009808
        %v1120 = vunpack.c.0.s8 %v1119
        %v1121 = vlaneseq
        %v1122 = vshrl.u32 %v1121, 7
        %v1123 = vsub.s32 %v1120, %v1122
        %v1124 = vrot.slane %v1116, %v1123
        %v1126 = vunpack.c.l.s4 1983009808
        %v1127 = vunpack.c.0.s8 %v1126
        %v1128 = vlaneseq
        %v1129 = vshrl.u32 %v1128, 7
        %v1130 = vsub.s32 %v1127, %v1129
        %v1131 = vrot.slane %v1117, %v1130
        %v1132 = vcombine.low %v1076, %v1092
        %v1133 = vcombine.high %v1076, %v1092
        %v1135 = vunpack.c.l.s4 1934713408
        %v1136 = vunpack.c.0.s8 %v1135
        %v1137 = vlaneseq
        %v1138 = vshrl.u32 %v1137, 7
        %v1139 = vsub.s32 %v1136, %v1138
        %v1140 = vrot.slane %v1132, %v1139
        %v1142 = vunpack.c.l.s4 1934713408
        %v1143 = vunpack.c.0.s8 %v1142
        %v1144 = vlaneseq
        %v1145 = vshrl.u32 %v1144, 7
        %v1146 = vsub.s32 %v1143, %v1145
        %v1147 = vrot.slane %v1133, %v1146
        %v1148 = vcombine.low %v1083, %v1099
        %v1149 = vcombine.high %v1083, %v1099
        %v1151 = vunpack.c.l.s4 1934713408
        %v1152 = vunpack.c.0.s8 %v1151
        %v1153 = vlaneseq
        %v1154 = vshrl.u32 %v1153, 7
        %v1155 = vsub.s32 %v1152, %v1154
        %v1156 = vrot.slane %v1148, %v1155
        %v1158 = vunpack.c.l.s4 1934713408
        %v1159 = vunpack.c.0.s8 %v1158
        %v1160 = vlaneseq
        %v1161 = vshrl.u32 %v1160, 7
        %v1162 = vsub.s32 %v1159, %v1161
        %v1163 = vrot.slane %v1149, %v1162
        %v1164 = vcombine.low %v1108, %v1124
        %v1165 = vcombine.high %v1108, %v1124
        %v1167 = vunpack.c.l.s4 1934713408
        %v1168 = vunpack.c.0.s8 %v1167
        %v1169 = vlaneseq
        %v1170 = vshrl.u32 %v1169, 7
        %v1171 = vsub.s32 %v1168, %v1170
        %v1172 = vrot.slane %v1164, %v1171
        %v1174 = vunpack.c.l.s4 1934713408
        %v1175 = vunpack.c.0.s8 %v1174
        %v1176 = vlaneseq
        %v1177 = vshrl.u32 %v1176, 7
        %v1178 = vsub.s32 %v1175, %v1177
        %v1179 = vrot.slane %v1165, %v1178
        %v1180 = vcombine.low %v1115, %v1131
        %v1181 = vcombine.high %v1115, %v1131
        %v1183 = vunpack.c.l.s4 1934713408
        %v1184 = vunpack.c.0.s8 %v1183
        %v1185 = vlaneseq
        %v1186 = vshrl.u32 %v1185, 7
        %v1187 = vsub.s32 %v1184, %v1186
        %v1188 = vrot.slane %v1180, %v1187
        %v1190 = vunpack.c.l.s4 1934713408
        %v1191 = vunpack.c.0.s8 %v1190
        %v1192 = vlaneseq
        %v1193 = vshrl.u32 %v1192, 7
        %v1194 = vsub.s32 %v1191, %v1193
        %v1195 = vrot.slane %v1181, %v1194
        %v1196 = vcombine.low %v1140, %v1172
        %v1197 = vcombine.high %v1140, %v1172
        %v1198 = vcombine.low %v1147, %v1179
        %v1199 = vcombine.high %v1147, %v1179
        %v1200 = vcombine.low %v1156, %v1188
        %v1201 = vcombine.high %v1156, %v1188
        %v1202 = vcombine.low %v1163, %v1195
        %v1203 = vcombine.high %v1163, %v1195
        %1205 = vrot.lane.b32.xlu0 %v1061, 16
        %v1206 = vpop.permute.xlu0 %1205
        %1209 = vrot.lane.b32.xlu0 %v1062, 32
        %v1210 = vpop.permute.xlu0 %1209
        %1213 = vrot.lane.b32.xlu0 %v1063, 48
        %v1214 = vpop.permute.xlu0 %1213
        %1217 = vrot.lane.b32.xlu0 %v1064, 64
        %v1218 = vpop.permute.xlu0 %1217
        %1221 = vrot.lane.b32.xlu0 %v1065, 80
        %v1222 = vpop.permute.xlu0 %1221
        %1225 = vrot.lane.b32.xlu0 %v1066, 96
        %v1226 = vpop.permute.xlu0 %1225
        %1229 = vrot.lane.b32.xlu0 %v1067, 112
        %v1230 = vpop.permute.xlu0 %1229
        %1233 = vrot.lane.b32.xlu0 %v1197, 16
        %v1234 = vpop.permute.xlu0 %1233
        %1237 = vrot.lane.b32.xlu0 %v1198, 32
        %v1238 = vpop.permute.xlu0 %1237
        %1241 = vrot.lane.b32.xlu0 %v1199, 48
        %v1242 = vpop.permute.xlu0 %1241
        %1245 = vrot.lane.b32.xlu0 %v1200, 64
        %v1246 = vpop.permute.xlu0 %1245
        %1249 = vrot.lane.b32.xlu0 %v1201, 80
        %v1250 = vpop.permute.xlu0 %1249
        %1253 = vrot.lane.b32.xlu0 %v1202, 96
        %v1254 = vpop.permute.xlu0 %1253
        %1257 = vrot.lane.b32.xlu0 %v1203, 112
        %v1258 = vpop.permute.xlu0 %1257
        %vm1260 = vcmask 130048
        %v1261 = vsel %vm1260, %v1060, %v1206
        %v1262 = vsel %vm203, %v1261, %v1210
        %vm1263 = vcmask 392192
        %v1264 = vsel %vm1263, %v1262, %v1214
        %vm1265 = vcmask 523264
        %v1266 = vsel %vm1265, %v1264, %v1218
        %vm1267 = vcmask 654336
        %v1268 = vsel %vm1267, %v1266, %v1222
        %vm1269 = vcmask 785408
        %v1270 = vsel %vm1269, %v1268, %v1226
        %vm1271 = vcmask 916480
        %v1272 = vsel %vm1271, %v1270, %v1230
        %v1273 = vsel %vm1260, %v1196, %v1234
        %v1274 = vsel %vm203, %v1273, %v1238
        %v1275 = vsel %vm1263, %v1274, %v1242
        %v1276 = vsel %vm1265, %v1275, %v1246
        %v1277 = vsel %vm1267, %v1276, %v1250
        %v1278 = vsel %vm1269, %v1277, %v1254
        %v1279 = vsel %vm1271, %v1278, %v1258
        %1280 = vst [vmem:[%s162] sm:$0xff] %v1272
        %1281 = vst [vmem:[%s162 + $0x8] sm:$0xff] %v1279
        %s1282 = sand.u32 %s74, 1
        %s1283 = scalar_lea.sflag [#allocation4], %s1282
        %s1284 = sand.u32 %s74, 1
        %s1285 = smul.addr %s1284, 16
        %s1286 = scalar_lea.vmem [#allocation5], %s1285
        // Predicated region
        $region33: #{tpu_custom_call.1} parent=27 // pred_check
          %p1287 = pneg %p84
        $region34: #{tpu_custom_call.1} parent=27 // pred_check_branch
          %1289 = sbr.rel (%p1287) target = $region36
        $region35: #{tpu_custom_call.1} parent=27 // pred_region
          %s1291 = ssub.s32 256, 256
          %1292 = vsyncadd %s1283, %s1291
          %s1293 = smul.addr %s19, 2
          %s1294 = smul.addr %s1293, 128
          %s1295 = scalar_lea.hbm %s2, %s1294
          %s1297 = sshll.u32 %s1286, 4
          %s1298 = int_to_ptr.vmem [resolvable:$true] %s1297
          %1300 = dma.vmem_to_hbm [thread:$0]  %s1298, 256, %s1295, %s1283
        $region36: #{tpu_custom_call.1} parent=27 // pred_fallthru
          _
      $region28: #{tpu_custom_call.1} parent=5 // pred_fallthru
        _
      %p1301 = scmp.le.s32.totalorder 2, %s14
      // Predicated region
      $region37: #{tpu_custom_call.1} parent=5 // pred_check
        %p1302 = pneg %p1301
      $region38: #{tpu_custom_call.1} parent=5 // pred_check_branch
        %1304 = sbr.rel (%p1302) target = $region40
      $region39: #{tpu_custom_call.1} parent=5 // pred_region
        %s1305 = ssub.s32 %s14, 2
        // Predicated region
        $region41: #{tpu_custom_call.1} parent=39 // pred_check
          %p1306 = pneg %p90
        $region42: #{tpu_custom_call.1} parent=39 // pred_check_branch
          %1308 = sbr.rel (%p1306) target = $region44
        $region43: #{tpu_custom_call.1} parent=39 // pred_region
          %s1309 = sand.u32 %s75, 1
          %s1310 = scalar_lea.sflag [#allocation4], %s1309
          %s1311 = sand.u32 %s75, 1
          %s1312 = smul.addr %s1311, 16
          %s1313 = scalar_lea.vmem [#allocation5], %s1312
          %1314 = dma.done %s1310, 256
        $region44: #{tpu_custom_call.1} parent=39 // pred_fallthru
          _
      $region40: #{tpu_custom_call.1} parent=5 // pred_fallthru
        _
    $region6: #{tpu_custom_call.1} parent=1 // loop_footer
      %s18 = sadd.s32 1, %s14
    $region7: #{tpu_custom_call.1} parent=1 // loop_footer_branch
      %13 = sbr.rel target = $region3
    $region8: #{tpu_custom_call.1} parent=1 // loop_exit
      _
    %1315 = vsyncpa [#allocation3], 1
    %s1316 = scalar_lea.sflag [#allocation3], 1
    %1317 = vsyncpa %s1316, 1
    %1318 = vsyncpa [#allocation4], 1
    %s1319 = scalar_lea.sflag [#allocation4], 1
    %1320 = vsyncpa %s1319, 1

</llo_original>
